<compile_context>
chip_gen: v5e
topology: v5e:2x2
jax: 0.10.0
libtpu: 0.0.40
codegen_flags: <defaults>
</compile_context>

<pallas_src>
import functools

import jax
import jax.numpy as jnp
from jax.experimental import pallas as pl
from jax.experimental.pallas import tpu as pltpu

_MiB = 1024 * 1024


def _vmem_capacity_bytes():
    """Physical per-TensorCore VMEM (128 MiB v5e/v6e, 64 MiB v7x)."""
    try:
        info = pltpu.get_tpu_info()
        cap = getattr(info, "vmem_capacity_bytes", None)
        if cap:
            return int(cap)
    except Exception:
        pass  # hardware query unavailable -> assume the smallest (v7x) VMEM
    return 64 * _MiB


def _round_up(x, m):
    return ((x + m - 1) // m) * m


# ----------------------------------------------------------------------------- kernels
def _roberta_output_flat_kernel(h_ref, res_ref, w_ref, p_ref, o_ref, *,
                                eps, mxu_dtype):
    """dense -> (+bias) -> (+residual) -> LayerNorm, full weight resident."""
    # MXU matmul, f32 accumulation.  Activation cast to the MXU feed dtype
    # happens in-kernel (free VPU work hidden under the matmul / DMA).
    x = jnp.dot(h_ref[...].astype(mxu_dtype), w_ref[...],
                preferred_element_type=jnp.float32)
    # dropout: inference mode -> identity
    # TODO(synk): training-mode dropout (pltpu.prng_random_bits mask) not wired in.
    y = x + p_ref[0:1, :] + res_ref[...].astype(jnp.float32)   # bias + residual
    mean = jnp.mean(y, axis=-1, keepdims=True)
    cent = y - mean
    var = jnp.mean(cent * cent, axis=-1, keepdims=True)
    scale = jax.lax.rsqrt(var + eps) * p_ref[1:2, :]            # fold gamma into scale
    o_ref[...] = (cent * scale + p_ref[2:3, :]).astype(o_ref.dtype)


def _roberta_output_ktiled_kernel(h_ref, res_ref, w_ref, p_ref, o_ref, acc_ref,
                                  *, eps, mxu_dtype):
    """Low-VMEM fallback: reduce over the intermediate dim with an f32 accumulator."""
    k = pl.program_id(1)

    @pl.when(k == 0)
    def _():
        acc_ref[...] = jnp.zeros_like(acc_ref)

    acc_ref[...] += jnp.dot(h_ref[...].astype(mxu_dtype), w_ref[...],
                            preferred_element_type=jnp.float32)

    @pl.when(k == pl.num_programs(1) - 1)
    def _():
        # dropout: inference mode -> identity
        y = acc_ref[...] + p_ref[0:1, :] + res_ref[...].astype(jnp.float32)
        mean = jnp.mean(y, axis=-1, keepdims=True)
        cent = y - mean
        var = jnp.mean(cent * cent, axis=-1, keepdims=True)
        scale = jax.lax.rsqrt(var + eps) * p_ref[1:2, :]
        o_ref[...] = (cent * scale + p_ref[2:3, :]).astype(o_ref.dtype)


# ----------------------------------------------------------------------------- planning
def _flat_vmem_bytes(tm, I, H, act_bytes, w_bytes, out_bytes):
    return (2 * I * H * w_bytes        # resident weight (2 pipeline buffers, fetched once)
            + 2 * tm * I * act_bytes   # hidden tiles (double-buffered)
            + 2 * tm * H * act_bytes   # residual tiles
            + 2 * tm * H * out_bytes   # output tiles
            + 2 * 3 * H * 4            # packed bias/gamma/beta
            + 3 * tm * H * 4)          # f32 LayerNorm temporaries headroom


def _ktiled_vmem_bytes(tm, tk, H, act_bytes, w_bytes, out_bytes):
    return (2 * tk * H * w_bytes       # weight k-slab (double-buffered)
            + 2 * tm * tk * act_bytes  # hidden k-slab
            + 2 * tm * H * act_bytes   # residual tiles
            + 2 * tm * H * out_bytes   # output tiles
            + 2 * 3 * H * 4
            + tm * H * 4               # f32 accumulator scratch
            + 3 * tm * H * 4)


def _choose_plan(tokens, I, H, tm_req, act_bytes, w_bytes, out_bytes,
                 budget, sublane):
    """Return (tm, k_tile-or-None).  Prefer the flat (weight-resident) path."""
    tm_cap = max(sublane, _round_up(tokens, sublane))
    cands = sorted({_round_up(max(sublane, min(t, tm_cap)), sublane)
                    for t in (tm_req, 1024, 512, 256, 128, sublane)},
                   reverse=True)
    for tm in cands:
        if _flat_vmem_bytes(tm, I, H, act_bytes, w_bytes, out_bytes) <= budget:
            return tm, None
    # K-tiled fallback with the *largest* row tile that fits (the weight is
    # re-streamed once per row tile, so big row tiles amortize that traffic).
    for tm in cands:
        for tk in (2048, 1024, 512, 256, 128):
            if I % tk:
                continue
            if _ktiled_vmem_bytes(tm, tk, H, act_bytes, w_bytes, out_bytes) <= budget:
                return tm, tk
    return cands[-1], (128 if I % 128 == 0 else None)


# ----------------------------------------------------------------------------- wrapper
def roberta_output(hidden_states, input_tensor, weight_t, bias, gamma, beta,
                   *, eps=1e-12, tm=None, k_tile=None, mxu_dtype=jnp.bfloat16):
    """Fused RobertaOutput forward (inference): LayerNorm(dense(h) + residual).

    hidden_states: [B, S, I]   input_tensor: [B, S, H]
    weight_t: [I, H] (dense.weight transposed)   bias/gamma/beta: [H]
    mxu_dtype: dtype fed to the MXU (bf16 default; accumulation & LN stay f32).
               Pass jnp.float32 for an exact f32 matmul.
    """
    B, S, I = hidden_states.shape
    H = input_tensor.shape[-1]
    tokens = B * S
    act_dtype = hidden_states.dtype
    out_dtype = act_dtype
    act_bytes = jnp.dtype(act_dtype).itemsize
    out_bytes = jnp.dtype(out_dtype).itemsize
    mxu_dtype = jnp.dtype(mxu_dtype)
    w_bytes = mxu_dtype.itemsize

    # Per-generation VMEM budget: leave headroom below the physical per-TC VMEM
    # (64 MiB on v7x, 128 MiB on v5e/v6e) for compiler-internal scratch.
    vmem_cap = _vmem_capacity_bytes()
    vmem_limit = int(min(100 * _MiB, 0.8 * vmem_cap))
    budget = vmem_limit - 8 * _MiB

    sublane = 16 if act_bytes == 2 else 8
    tm_given = tm is not None
    if not tm_given:
        tm = 1024 if vmem_cap >= 96 * _MiB else 512
    tm = _round_up(max(sublane, min(int(tm), _round_up(tokens, sublane))), sublane)

    if k_tile is None:
        if tm_given:
            if _flat_vmem_bytes(tm, I, H, act_bytes, w_bytes, out_bytes) > budget:
                for tk in (2048, 1024, 512, 256, 128):
                    if I % tk == 0 and _ktiled_vmem_bytes(
                            tm, tk, H, act_bytes, w_bytes, out_bytes) <= budget:
                        k_tile = tk
                        break
        else:
            tm, k_tile = _choose_plan(tokens, I, H, tm, act_bytes, w_bytes,
                                      out_bytes, budget, sublane)
    if k_tile is not None:
        assert I % k_tile == 0, "k_tile must divide intermediate_size"

    n_row_tiles = pl.cdiv(tokens, tm)

    # No host-side padding: the last partial row block reads undefined trailing
    # rows, but matmul + LayerNorm are row-independent and Pallas masks
    # out-of-bounds output writes, so valid rows are never contaminated.
    h2d = hidden_states.reshape(tokens, I)
    r2d = input_tensor.reshape(tokens, H)
    w2d = weight_t if weight_t.dtype == mxu_dtype else weight_t.astype(mxu_dtype)
    params = jnp.stack([bias, gamma, beta]).astype(jnp.float32)      # (3, H)

    weight_reads = 1 if k_tile is None else n_row_tiles
    cost = pl.CostEstimate(
        flops=2 * tokens * I * H,
        transcendentals=tokens,                                      # one rsqrt per row
        bytes_accessed=(tokens * I * act_bytes + tokens * H * act_bytes
                        + tokens * H * out_bytes
                        + weight_reads * I * H * w_bytes + 3 * H * 4),
    )

    if k_tile is None:
        # Flat: full weight resident in VMEM (DMA'd once), 1-D grid over row tiles.
        grid = (n_row_tiles,)
        in_specs = [
            pl.BlockSpec((tm, I), lambda i: (i, 0)),                 # hidden
            pl.BlockSpec((tm, H), lambda i: (i, 0)),                 # residual
            pl.BlockSpec((I, H), lambda i: (0, 0)),                  # weight (constant block)
            pl.BlockSpec((3, H), lambda i: (0, 0)),                  # bias/gamma/beta
        ]
        out_specs = pl.BlockSpec((tm, H), lambda i: (i, 0))
        scratch = []
        kern = functools.partial(_roberta_output_flat_kernel, eps=eps,
                                 mxu_dtype=mxu_dtype)
        dims = ("parallel",)                                         # megacore on v7x
    else:
        nk = I // k_tile
        grid = (n_row_tiles, nk)
        in_specs = [
            pl.BlockSpec((tm, k_tile), lambda i, k: (i, k)),         # hidden k-slab
            pl.BlockSpec((tm, H), lambda i, k: (i, 0)),              # residual
            pl.BlockSpec((k_tile, H), lambda i, k: (k, 0)),          # weight k-slab
            pl.BlockSpec((3, H), lambda i, k: (0, 0)),               # bias/gamma/beta
        ]
        out_specs = pl.BlockSpec((tm, H), lambda i, k: (i, 0))
        scratch = [pltpu.VMEM((tm, H), jnp.float32)]
        kern = functools.partial(_roberta_output_ktiled_kernel, eps=eps,
                                 mxu_dtype=mxu_dtype)
        dims = ("parallel", "arbitrary")                             # reduction axis last

    out2d = pl.pallas_call(
        kern,
        out_shape=jax.ShapeDtypeStruct((tokens, H), out_dtype),
        grid_spec=pltpu.PrefetchScalarGridSpec(
            num_scalar_prefetch=0,
            grid=grid,
            in_specs=in_specs,
            out_specs=out_specs,
            scratch_shapes=scratch,
        ),
        compiler_params=pltpu.CompilerParams(
            dimension_semantics=dims,
            vmem_limit_bytes=vmem_limit,
        ),
        cost_estimate=cost,
    )(h2d, r2d, w2d, params)

    return out2d.reshape(B, S, H)


# ----------------------------------------------------------------------------- reference
def reference(hidden_states, input_tensor, weight_t, bias, gamma, beta, eps=1e-12):
    x = jnp.einsum("bsi,ih->bsh", hidden_states, weight_t,
                   precision=jax.lax.Precision.HIGHEST) + bias
    y = x + input_tensor
    mean = jnp.mean(y, axis=-1, keepdims=True)
    var = jnp.mean((y - mean) ** 2, axis=-1, keepdims=True)
    return (y - mean) * jax.lax.rsqrt(var + eps) * gamma + beta


if __name__ == "__main__":
    # small RoBERTa-style config: batch=2, seq=8, hidden=128, intermediate=2*hidden
    B, S, H, I = 2, 8, 128, 256
    eps = 1e-12                                       # HF layer_norm_eps default

    key = jax.random.PRNGKey(0)
    k1, k2, k3, k4 = jax.random.split(key, 4)

    hidden_states = jax.random.normal(k1, (B, S, I), dtype=jnp.float32)
    input_tensor = jax.random.normal(k2, (B, S, H), dtype=jnp.float32)

    # deterministic synthetic parameters (not a checkpoint)
    weight_t = jax.random.normal(k3, (I, H), dtype=jnp.float32) * 0.02  # dense.weight.T
    bias = jax.random.normal(k4, (H,), dtype=jnp.float32) * 0.02        # dense.bias
    gamma = jnp.ones((H,), dtype=jnp.float32)                           # LayerNorm.weight
    beta = jnp.zeros((H,), dtype=jnp.float32)                           # LayerNorm.bias

    ref = reference(hidden_states, input_tensor, weight_t, bias, gamma, beta, eps=eps)

    # 1) default: flat weight-resident path, bf16 MXU feed, f32 accumulation + LN
    out = roberta_output(hidden_states, input_tensor, weight_t, bias, gamma, beta, eps=eps)
    out = jax.block_until_ready(out)
    assert out.shape == (B, S, H)
    assert jnp.allclose(out, ref, atol=2e-2, rtol=2e-2), \
        float(jnp.max(jnp.abs(out - ref)))

    # 2) exact f32 MXU feed
    out_f32 = roberta_output(hidden_states, input_tensor, weight_t, bias, gamma, beta,
                             eps=eps, mxu_dtype=jnp.float32)
    out_f32 = jax.block_until_ready(out_f32)
    assert jnp.allclose(out_f32, ref, atol=1e-4, rtol=1e-4), \
        float(jnp.max(jnp.abs(out_f32 - ref)))

    # 3) forced K-tiled accumulator path (exercises the low-VMEM fallback)
    out_k = roberta_output(hidden_states, input_tensor, weight_t, bias, gamma, beta,
                           eps=eps, k_tile=128, mxu_dtype=jnp.float32)
    out_k = jax.block_until_ready(out_k)
    assert jnp.allclose(out_k, ref, atol=1e-4, rtol=1e-4), \
        float(jnp.max(jnp.abs(out_k - ref)))

    # 4) ragged token count (tokens % tm != 0): partial edge block, no host padding
    hs7 = hidden_states[:, :7]
    it7 = input_tensor[:, :7]
    ref7 = reference(hs7, it7, weight_t, bias, gamma, beta, eps=eps)
    out7 = roberta_output(hs7, it7, weight_t, bias, gamma, beta,
                          eps=eps, tm=8, mxu_dtype=jnp.float32)
    out7 = jax.block_until_ready(out7)
    assert out7.shape == (B, 7, H)
    assert jnp.allclose(out7, ref7, atol=1e-4, rtol=1e-4), \
        float(jnp.max(jnp.abs(out7 - ref7)))

    print("KERNEL_OK")
</pallas_src>

<mosaic_0001>
module attributes {stable_mosaic.version = 11 : i64} {
  func.func @_roberta_output_flat_kernel(%arg0: i32, %arg1: memref<16x256xf32, #tpu.memory_space<vmem>>, %arg2: memref<16x128xf32, #tpu.memory_space<vmem>>, %arg3: memref<256x128xbf16, #tpu.memory_space<vmem>>, %arg4: memref<3x128xf32, #tpu.memory_space<vmem>>, %arg5: memref<16x128xf32, #tpu.memory_space<vmem>>) attributes {dimension_semantics = [#tpu.dimension_semantics<parallel>], iteration_bounds = array<i64: 1>, scalar_prefetch = 0 : i64, scratch_operands = 0 : i64, tpu.core_type = #tpu.core_type<tc>, window_params = [{transform_indices = @transform_0, window_bounds = array<i64: 16, 256>}, {transform_indices = @transform_1, window_bounds = array<i64: 16, 128>}, {pipeline_mode = #tpu.pipeline_mode<synchronous>, transform_indices = @transform_2, window_bounds = array<i64: 256, 128>}, {pipeline_mode = #tpu.pipeline_mode<synchronous>, transform_indices = @transform_3, window_bounds = array<i64: 3, 128>}, {transform_indices = @transform_4, window_bounds = array<i64: 16, 128>}]} {
    %c0 = arith.constant 0 : index
    %c0_0 = arith.constant 0 : index
    %0 = vector.load %arg1[%c0, %c0_0] : memref<16x256xf32, #tpu.memory_space<vmem>>, vector<16x256xf32>
    %1 = arith.truncf %0 : vector<16x256xf32> to vector<16x256xbf16>
    %c0_1 = arith.constant 0 : index
    %c0_2 = arith.constant 0 : index
    %2 = vector.load %arg3[%c0_1, %c0_2] : memref<256x128xbf16, #tpu.memory_space<vmem>>, vector<256x128xbf16>
    %cst = arith.constant dense<0.000000e+00> : vector<16x128xf32>
    %3 = tpu.matmul %1, %2, %cst {dimension_numbers = #tpu.dot_dimension_numbers<[1], [0], [0], [1], [0, 0, 1, 1], [], []>} : vector<16x256xbf16>, vector<256x128xbf16>, vector<16x128xf32> -> vector<16x128xf32>
    %c0_3 = arith.constant 0 : index
    %c0_4 = arith.constant 0 : index
    %4 = vector.load %arg4[%c0_3, %c0_4] : memref<3x128xf32, #tpu.memory_space<vmem>>, vector<1x128xf32>
    %5 = vector.broadcast %4 : vector<1x128xf32> to vector<16x128xf32>
    %6 = arith.addf %3, %5 : vector<16x128xf32>
    %c0_5 = arith.constant 0 : index
    %c0_6 = arith.constant 0 : index
    %7 = vector.load %arg2[%c0_5, %c0_6] : memref<16x128xf32, #tpu.memory_space<vmem>>, vector<16x128xf32>
    %8 = arith.addf %6, %7 : vector<16x128xf32>
    %cst_7 = arith.constant dense<0.000000e+00> : vector<16xf32>
    %9 = vector.multi_reduction <add>, %8, %cst_7 [1] : vector<16x128xf32> to vector<16xf32>
    %10 = vector.shape_cast %9 : vector<16xf32> to vector<16x1xf32>
    %cst_8 = arith.constant 1.280000e+02 : f32
    %11 = vector.broadcast %cst_8 : f32 to vector<16x1xf32>
    %12 = arith.divf %10, %11 : vector<16x1xf32>
    %13 = vector.broadcast %12 : vector<16x1xf32> to vector<16x128xf32>
    %14 = arith.subf %8, %13 : vector<16x128xf32>
    %15 = arith.mulf %14, %14 : vector<16x128xf32>
    %cst_9 = arith.constant dense<0.000000e+00> : vector<16xf32>
    %16 = vector.multi_reduction <add>, %15, %cst_9 [1] : vector<16x128xf32> to vector<16xf32>
    %17 = vector.shape_cast %16 : vector<16xf32> to vector<16x1xf32>
    %cst_10 = arith.constant 1.280000e+02 : f32
    %18 = vector.broadcast %cst_10 : f32 to vector<16x1xf32>
    %19 = arith.divf %17, %18 : vector<16x1xf32>
    %cst_11 = arith.constant 9.99999996E-13 : f32
    %20 = vector.broadcast %cst_11 : f32 to vector<16x1xf32>
    %21 = arith.addf %19, %20 : vector<16x1xf32>
    %22 = math.rsqrt %21 : vector<16x1xf32>
    %c1 = arith.constant 1 : index
    %c0_12 = arith.constant 0 : index
    %23 = vector.load %arg4[%c1, %c0_12] : memref<3x128xf32, #tpu.memory_space<vmem>>, vector<1x128xf32>
    %24 = vector.broadcast %22 : vector<16x1xf32> to vector<16x128xf32>
    %25 = vector.broadcast %23 : vector<1x128xf32> to vector<16x128xf32>
    %26 = arith.mulf %24, %25 : vector<16x128xf32>
    %27 = arith.mulf %14, %26 : vector<16x128xf32>
    %c2 = arith.constant 2 : index
    %c0_13 = arith.constant 0 : index
    %28 = vector.load %arg4[%c2, %c0_13] : memref<3x128xf32, #tpu.memory_space<vmem>>, vector<1x128xf32>
    %29 = vector.broadcast %28 : vector<1x128xf32> to vector<16x128xf32>
    %30 = arith.addf %27, %29 : vector<16x128xf32>
    %c0_14 = arith.constant 0 : index
    %c0_15 = arith.constant 0 : index
    %31 = vector.load %arg5[%c0_14, %c0_15] : memref<16x128xf32, #tpu.memory_space<vmem>>, vector<16x128xf32>
    tpu.vector_store %arg5[%c0_14, %c0_15], %30 {strides = array<i32>} : memref<16x128xf32, #tpu.memory_space<vmem>>, vector<16x128xf32>,
    return
  }
  func.func @transform_0(%arg0: i32) -> (i32, i32) {
    %c0_i32 = arith.constant 0 : i32
    %c0_i32_0 = arith.constant 0 : i32
    return %arg0, %c0_i32 : i32, i32
  }
  func.func @transform_1(%arg0: i32) -> (i32, i32) {
    %c0_i32 = arith.constant 0 : i32
    %c0_i32_0 = arith.constant 0 : i32
    return %arg0, %c0_i32 : i32, i32
  }
  func.func @transform_2(%arg0: i32) -> (i32, i32) {
    %c0_i32 = arith.constant 0 : i32
    %c0_i32_0 = arith.constant 0 : i32
    %c0_i32_1 = arith.constant 0 : i32
    return %c0_i32, %c0_i32_0 : i32, i32
  }
  func.func @transform_3(%arg0: i32) -> (i32, i32) {
    %c0_i32 = arith.constant 0 : i32
    %c0_i32_0 = arith.constant 0 : i32
    %c0_i32_1 = arith.constant 0 : i32
    return %c0_i32, %c0_i32_0 : i32, i32
  }
  func.func @transform_4(%arg0: i32) -> (i32, i32) {
    %c0_i32 = arith.constant 0 : i32
    %c0_i32_0 = arith.constant 0 : i32
    return %arg0, %c0_i32 : i32, i32
  }
}

</mosaic_0001>

<llo_original>
// kernel: tpu_custom_call.1
$region0: #{tpu_custom_call.1}
  #allocation0 [shape = 'u32[]', space=smem, size = 0x4, offset = 0x4, fixed_abs, tag = 'smem constant byte address 0x4 - core index']
  #allocation1 [shape = 'u32[72,128]{1,0:T(1,128)}', space=vmem, size = 0x9000, scoped, tag = 'internal scratch']
  %s0 = inlined_call_operand.hbm [shape: f32[16,256], index: 0, kind: input, shape index: {}]
  %s1 = inlined_call_operand.hbm [shape: f32[16,128], index: 1, kind: input, shape index: {}]
  %s2 = inlined_call_operand.hbm [shape: bf16[256,128], index: 2, kind: input, shape index: {}]
  %s3 = inlined_call_operand.hbm [shape: f32[3,128], index: 3, kind: input, shape index: {}]
  %s4 = inlined_call_operand.hbm [shape: f32[16,128], index: 4, kind: output, shape index: {}]
  %s5 = sld [smem:[#allocation0]]
  $region42: #{tpu_custom_call.1} parent=0
    _
  %s7 = ssub.s32 1, %s5
  %s8 = scalar_select 0, %s7, %s5
  $region1: #{tpu_custom_call.1} parent=0
    #allocation2 [shape = 'u8[16384]{0}', space=vmem, size = 0x4000, scoped, tag = 'input window, operand 0, single buffered']
    #allocation3 [shape = 's32[1]{0}', space=sflag, size = 0x4, scoped, tag = 'scoped memory for tpu_custom_call.1']
    #allocation4 [shape = 's32[1]{0}', space=sflag, size = 0x4, scoped, tag = 'scoped memory for tpu_custom_call.1']
    #allocation5 [shape = 'u8[8192]{0}', space=vmem, size = 0x2000, scoped, tag = 'input window, operand 1, single buffered']
    #allocation6 [shape = 's32[1]{0}', space=sflag, size = 0x4, scoped, tag = 'scoped memory for tpu_custom_call.1']
    #allocation7 [shape = 'u8[65536]{0}', space=vmem, size = 0x10000, scoped, tag = 'input window, operand 2, single buffered']
    #allocation8 [shape = 'u8[2048]{0}', space=vmem, size = 0x800, scoped, tag = 'input window, operand 3, single buffered']
    #allocation9 [shape = 's32[1]{0}', space=sflag, size = 0x4, scoped, tag = 'scoped memory for tpu_custom_call.1']
    #allocation10 [shape = 'u8[8192]{0}', space=vmem, size = 0x2000, scoped, tag = 'output window, operand 0, single buffered']
    %9 = vsyncpa [#allocation3], 0
    %10 = vsyncpa [#allocation6], 0
    %11 = vsyncpa [#allocation9], 0
    %12 = vsyncpa [#allocation4], 0
    // Predicated region
    $region2: #{tpu_custom_call.1} parent=1 // pred_check
      _
    $region3: #{tpu_custom_call.1} parent=1 // pred_check_branch
      %14 = sbr.rel (0) target = $region5
    $region4: #{tpu_custom_call.1} parent=1 // pred_region
      %16 = vsyncadd [#allocation3], 0
      %s17 = sshll.u32 %s0, 4
      %s18 = int_to_ptr.hbm [resolvable:$true] %s17
      %s19 = sshll.u32 [#allocation2], 4
      %s20 = int_to_ptr.vmem [resolvable:$true] %s19
      %25 = dma.hbm_to_vmem [thread:$0]  %s18, 512, %s20, [#allocation3], 256, 256, 16
    $region5: #{tpu_custom_call.1} parent=1 // pred_fallthru
      _
    // Predicated region
    $region6: #{tpu_custom_call.1} parent=1 // pred_check
      _
    $region7: #{tpu_custom_call.1} parent=1 // pred_check_branch
      %27 = sbr.rel (0) target = $region9
    $region8: #{tpu_custom_call.1} parent=1 // pred_region
      %29 = vsyncadd [#allocation6], 0
      %s30 = sshll.u32 %s1, 4
      %s31 = int_to_ptr.hbm [resolvable:$true] %s30
      %s32 = sshll.u32 [#allocation5], 4
      %s33 = int_to_ptr.vmem [resolvable:$true] %s32
      %38 = dma.hbm_to_vmem [thread:$0]  %s31, 256, %s33, [#allocation6], 128, 128, 8
    $region9: #{tpu_custom_call.1} parent=1 // pred_fallthru
      _
    // Predicated region
    $region10: #{tpu_custom_call.1} parent=1 // pred_check
      _
    $region11: #{tpu_custom_call.1} parent=1 // pred_check_branch
      %40 = sbr.rel (0) target = $region13
    $region12: #{tpu_custom_call.1} parent=1 // pred_region
      %42 = vsyncadd [#allocation6], 0
      %s43 = sshll.u32 %s2, 4
      %s44 = int_to_ptr.hbm [resolvable:$true] %s43
      %s45 = sshll.u32 [#allocation7], 4
      %s46 = int_to_ptr.vmem [resolvable:$true] %s45
      %51 = dma.hbm_to_vmem [thread:$0]  %s44, 2048, %s46, [#allocation6], 64, 64, 4
    $region13: #{tpu_custom_call.1} parent=1 // pred_fallthru
      _
    // Predicated region
    $region14: #{tpu_custom_call.1} parent=1 // pred_check
      _
    $region15: #{tpu_custom_call.1} parent=1 // pred_check_branch
      %53 = sbr.rel (0) target = $region17
    $region16: #{tpu_custom_call.1} parent=1 // pred_region
      %55 = vsyncadd [#allocation9], 0
      %s57 = sshll.u32 %s3, 4
      %s58 = int_to_ptr.hbm [resolvable:$true] %s57
      %s59 = sshll.u32 [#allocation8], 4
      %s60 = int_to_ptr.vmem [resolvable:$true] %s59
      %62 = dma.hbm_to_vmem [thread:$0]  %s58, 64, %s60, [#allocation9]
    $region17: #{tpu_custom_call.1} parent=1 // pred_fallthru
      _
    // Predicated region
    $region18: #{tpu_custom_call.1} parent=1 // pred_check
      _
    $region19: #{tpu_custom_call.1} parent=1 // pred_check_branch
      %64 = sbr.rel (0) target = $region21
    $region20: #{tpu_custom_call.1} parent=1 // pred_region
      %66 = dma.done [#allocation3], 512
    $region21: #{tpu_custom_call.1} parent=1 // pred_fallthru
      _
    // Predicated region
    $region22: #{tpu_custom_call.1} parent=1 // pred_check
      _
    $region23: #{tpu_custom_call.1} parent=1 // pred_check_branch
      %68 = sbr.rel (0) target = $region25
    $region24: #{tpu_custom_call.1} parent=1 // pred_region
      %70 = dma.done [#allocation6], 256
    $region25: #{tpu_custom_call.1} parent=1 // pred_fallthru
      _
    // Predicated region
    $region26: #{tpu_custom_call.1} parent=1 // pred_check
      _
    $region27: #{tpu_custom_call.1} parent=1 // pred_check_branch
      %72 = sbr.rel (0) target = $region29
    $region28: #{tpu_custom_call.1} parent=1 // pred_region
      %74 = dma.done [#allocation6], 2048
    $region29: #{tpu_custom_call.1} parent=1 // pred_fallthru
      _
    // Predicated region
    $region30: #{tpu_custom_call.1} parent=1 // pred_check
      _
    $region31: #{tpu_custom_call.1} parent=1 // pred_check_branch
      %76 = sbr.rel (0) target = $region33
    $region32: #{tpu_custom_call.1} parent=1 // pred_region
      %78 = dma.done [#allocation9], 64
    $region33: #{tpu_custom_call.1} parent=1 // pred_fallthru
      _
    %v79 = vld [vmem:[#allocation2] sm:$0xff]
    %v80 = vld [vmem:[#allocation2 + $0x8] sm:$0xff]
    %v81 = vld [vmem:[#allocation2 + $0x10] sm:$0xff]
    %v82 = vld [vmem:[#allocation2 + $0x18] sm:$0xff]
    %v83 = vpack.c.bf16 %v81, %v79
    %v84 = vpack.c.bf16 %v82, %v80
    %v85 = vld [vmem:[#allocation7] sm:$0xf]
    %v86 = vld [vmem:[#allocation7 + $0x4] sm:$0xf]
    %v87 = vld [vmem:[#allocation7 + $0x8] sm:$0xf]
    %v88 = vld [vmem:[#allocation7 + $0xc] sm:$0xf]
    %v89 = vld [vmem:[#allocation7 + $0x10] sm:$0xf]
    %v90 = vld [vmem:[#allocation7 + $0x14] sm:$0xf]
    %v91 = vld [vmem:[#allocation7 + $0x18] sm:$0xf]
    %v92 = vld [vmem:[#allocation7 + $0x1c] sm:$0xf]
    %v93 = vld [vmem:[#allocation7 + $0x20] sm:$0xf]
    %v94 = vld [vmem:[#allocation7 + $0x24] sm:$0xf]
    %v95 = vld [vmem:[#allocation7 + $0x28] sm:$0xf]
    %v96 = vld [vmem:[#allocation7 + $0x2c] sm:$0xf]
    %v97 = vld [vmem:[#allocation7 + $0x30] sm:$0xf]
    %v98 = vld [vmem:[#allocation7 + $0x34] sm:$0xf]
    %v99 = vld [vmem:[#allocation7 + $0x38] sm:$0xf]
    %v100 = vld [vmem:[#allocation7 + $0x3c] sm:$0xf]
    %v101 = vld [vmem:[#allocation7 + $0x40] sm:$0xf]
    %v102 = vld [vmem:[#allocation7 + $0x44] sm:$0xf]
    %v103 = vld [vmem:[#allocation7 + $0x48] sm:$0xf]
    %v104 = vld [vmem:[#allocation7 + $0x4c] sm:$0xf]
    %v105 = vld [vmem:[#allocation7 + $0x50] sm:$0xf]
    %v106 = vld [vmem:[#allocation7 + $0x54] sm:$0xf]
    %v107 = vld [vmem:[#allocation7 + $0x58] sm:$0xf]
    %v108 = vld [vmem:[#allocation7 + $0x5c] sm:$0xf]
    %v109 = vld [vmem:[#allocation7 + $0x60] sm:$0xf]
    %v110 = vld [vmem:[#allocation7 + $0x64] sm:$0xf]
    %v111 = vld [vmem:[#allocation7 + $0x68] sm:$0xf]
    %v112 = vld [vmem:[#allocation7 + $0x6c] sm:$0xf]
    %v113 = vld [vmem:[#allocation7 + $0x70] sm:$0xf]
    %v114 = vld [vmem:[#allocation7 + $0x74] sm:$0xf]
    %v115 = vld [vmem:[#allocation7 + $0x78] sm:$0xf]
    %v116 = vld [vmem:[#allocation7 + $0x7c] sm:$0xf]
    %v117 = vld [vmem:[#allocation8] sm:$0x1]
    %v118 = vperm.slane %v117, 0
    %v151 = vunpack.c.l.b16 %v85
    %v152 = vunpack.c.l.b16 %v86
    %v153 = vunpack.c.l.b16 %v87
    %v154 = vunpack.c.l.b16 %v88
    %v155 = vunpack.c.l.b16 %v89
    %v156 = vunpack.c.l.b16 %v90
    %v157 = vunpack.c.l.b16 %v91
    %v158 = vunpack.c.l.b16 %v92
    %v159 = vunpack.c.l.b16 %v93
    %v160 = vunpack.c.l.b16 %v94
    %v161 = vunpack.c.l.b16 %v95
    %v162 = vunpack.c.l.b16 %v96
    %v163 = vunpack.c.l.b16 %v97
    %v164 = vunpack.c.l.b16 %v98
    %v165 = vunpack.c.l.b16 %v99
    %v166 = vunpack.c.l.b16 %v100
    %v167 = vunpack.c.l.b16 %v101
    %v168 = vunpack.c.l.b16 %v102
    %v169 = vunpack.c.l.b16 %v103
    %v170 = vunpack.c.l.b16 %v104
    %v171 = vunpack.c.l.b16 %v105
    %v172 = vunpack.c.l.b16 %v106
    %v173 = vunpack.c.l.b16 %v107
    %v174 = vunpack.c.l.b16 %v108
    %v175 = vunpack.c.l.b16 %v109
    %v176 = vunpack.c.l.b16 %v110
    %v177 = vunpack.c.l.b16 %v111
    %v178 = vunpack.c.l.b16 %v112
    %v179 = vunpack.c.l.b16 %v113
    %v180 = vunpack.c.l.b16 %v114
    %v181 = vunpack.c.l.b16 %v115
    %v182 = vunpack.c.l.b16 %v116
    %v183 = vpack.c.b16 %v152, %v151
    %v184 = vpack.c.b16 %v154, %v153
    %v185 = vpack.c.b16 %v156, %v155
    %v186 = vpack.c.b16 %v158, %v157
    %v187 = vpack.c.b16 %v160, %v159
    %v188 = vpack.c.b16 %v162, %v161
    %v189 = vpack.c.b16 %v164, %v163
    %v190 = vpack.c.b16 %v166, %v165
    %v191 = vpack.c.b16 %v168, %v167
    %v192 = vpack.c.b16 %v170, %v169
    %v193 = vpack.c.b16 %v172, %v171
    %v194 = vpack.c.b16 %v174, %v173
    %v195 = vpack.c.b16 %v176, %v175
    %v196 = vpack.c.b16 %v178, %v177
    %v197 = vpack.c.b16 %v180, %v179
    %v198 = vpack.c.b16 %v182, %v181
    %215 = vmatpush.bf16.msra.mxu0 %v190
    %216 = vmatpush.bf16.msra.mxu0 %v189
    %217 = vmatpush.bf16.msra.mxu0 %v188
    %218 = vmatpush.bf16.msra.mxu0 %v187
    %219 = vmatpush.bf16.msra.mxu0 %v186
    %220 = vmatpush.bf16.msra.mxu0 %v185
    %221 = vmatpush.bf16.msra.mxu0 %v184
    %222 = vmatpush.bf16.msra.mxu0 %v183
    %223 = vmatmul.bf16.gmra.mxu0 %v83
    %v224 = vpop.f32.mrf.mxu0
    %v225 = vadd.f32 %v118, %v224
    %v226 = vpop.f32.mrf.mxu0
    %v227 = vadd.f32 %v118, %v226
    %228 = vdwg.mxu0
    %229 = vmatpush.bf16.msra.mxu0 %v198
    %230 = vmatpush.bf16.msra.mxu0 %v197
    %231 = vmatpush.bf16.msra.mxu0 %v196
    %232 = vmatpush.bf16.msra.mxu0 %v195
    %233 = vmatpush.bf16.msra.mxu0 %v194
    %234 = vmatpush.bf16.msra.mxu0 %v193
    %235 = vmatpush.bf16.msra.mxu0 %v192
    %236 = vmatpush.bf16.msra.mxu0 %v191
    %237 = vmatmul.bf16.gmra.mxu0 %v84
    %v238 = vpop.f32.mrf.mxu0
    %v239 = vadd.f32 %v225, %v238
    %v240 = vpop.f32.mrf.mxu0
    %v241 = vadd.f32 %v227, %v240
    %242 = vdwg.mxu0
    %v243 = vld [vmem:[#allocation5] sm:$0xff]
    %v244 = vld [vmem:[#allocation5 + $0x8] sm:$0xff]
    %v245 = vadd.f32 %v239, %v243
    %v246 = vadd.f32 %v241, %v244
    %247 = vadd.xlane.f32.xlu0 %v245
    %v248 = vpop.xlane.xlu0 %247
    %249 = vadd.xlane.f32.xlu0 %v246
    %v250 = vpop.xlane.xlu0 %249
    %v251 = vrcp.pop 128.0
    %v252 = vmul.f32 128.0, %v251
    %v253 = vsub.f32 1.0, %v252
    %v254 = vmul.f32 %v251, %v253
    %v255 = vadd.f32 %v251, %v254
    %vm256 = vweird.f32 %v251
    %v257 = vsel %vm256, %v251, %v255
    %v258 = vmul.f32 %v248, %v257
    %v259 = vmul.f32 %v250, %v257
    %v260 = vsub.f32 %v245, %v258
    %v261 = vsub.f32 %v246, %v259
    %v262 = vmul.f32 %v260, %v260
    %v263 = vmul.f32 %v261, %v261
    %264 = vadd.xlane.f32.xlu0 %v262
    %v265 = vpop.xlane.xlu0 %264
    %266 = vadd.xlane.f32.xlu0 %v263
    %v267 = vpop.xlane.xlu0 %266
    %v268 = vmul.f32 %v265, %v257
    %v269 = vmul.f32 %v267, %v257
    %v270 = vadd.f32 %v268, 1e-12
    %v271 = vadd.f32 %v269, 1e-12
    %v272 = vrsqrt.pop %v270
    %v273 = vmul.f32 %v272, %v270
    %v274 = vmul.f32 %v273, %v272
    %v275 = vmul.f32 0.5, %v274
    %v276 = vsub.f32 1.5, %v275
    %v277 = vmul.f32 %v272, %v276
    %vm278 = vweird.f32 %v270
    %vm279 = vweird.f32 %v272
    %vm280 = vmor %vm278, %vm279
    %v281 = vsel %vm280, %v272, %v277
    %v282 = vrsqrt.pop %v271
    %v283 = vmul.f32 %v282, %v271
    %v284 = vmul.f32 %v283, %v282
    %v285 = vmul.f32 0.5, %v284
    %v286 = vsub.f32 1.5, %v285
    %v287 = vmul.f32 %v282, %v286
    %vm288 = vweird.f32 %v271
    %vm289 = vweird.f32 %v282
    %vm290 = vmor %vm288, %vm289
    %v291 = vsel %vm290, %v282, %v287
    %v292 = vld [vmem:[#allocation8 + $0x1] sm:$0x1]
    %v293 = vperm.slane %v292, 0
    %v294 = vmul.f32 %v281, %v293
    %v295 = vmul.f32 %v291, %v293
    %v296 = vmul.f32 %v260, %v294
    %v297 = vmul.f32 %v261, %v295
    %v298 = vld [vmem:[#allocation8 + $0x2] sm:$0x1]
    %v299 = vperm.slane %v298, 0
    %v300 = vadd.f32 %v296, %v299
    %v301 = vadd.f32 %v297, %v299
    %302 = vst [vmem:[#allocation10] sm:$0xff] %v300
    %303 = vst [vmem:[#allocation10 + $0x8] sm:$0xff] %v301
    // Predicated region
    $region34: #{tpu_custom_call.1} parent=1 // pred_check
      _
    $region35: #{tpu_custom_call.1} parent=1 // pred_check_branch
      %305 = sbr.rel (0) target = $region37
    $region36: #{tpu_custom_call.1} parent=1 // pred_region
      %307 = vsyncadd [#allocation4], 0
      %s308 = sshll.u32 [#allocation10], 4
      %s309 = int_to_ptr.vmem [resolvable:$true] %s308
      %s310 = sshll.u32 %s4, 4
      %s311 = int_to_ptr.hbm [resolvable:$true] %s310
      %316 = dma.vmem_to_hbm [thread:$0]  %s309, 256, %s311, [#allocation4], 128, 128, 8
    $region37: #{tpu_custom_call.1} parent=1 // pred_fallthru
      _
    // Predicated region
    $region38: #{tpu_custom_call.1} parent=1 // pred_check
      _
    $region39: #{tpu_custom_call.1} parent=1 // pred_check_branch
      %318 = sbr.rel (0) target = $region41
    $region40: #{tpu_custom_call.1} parent=1 // pred_region
      %320 = dma.done [#allocation4], 256
    $region41: #{tpu_custom_call.1} parent=1 // pred_fallthru
      _
    %321 = vsyncpa [#allocation3], 1
    %322 = vsyncpa [#allocation6], 1
    %323 = vsyncpa [#allocation9], 1
    %324 = vsyncpa [#allocation4], 1

</llo_original>
